<compile_context>
chip_gen: v7x
topology: tpu7x:2x2x1
jax: 0.10.0
libtpu: 0.0.40
codegen_flags: <defaults>
</compile_context>

<pallas_src>
from math import pi

import numpy as np

import jax
import jax.numpy as jnp
from jax.experimental import pallas as pl
from jax.experimental.pallas import tpu as pltpu


def _plan_tiles(batch: int, dim: int, out_dim: int,
                in_itemsize: int, out_itemsize: int) -> tuple[int, int]:
    """Pick the batch tile and scoped-VMEM limit for this write-bound op."""
    try:
        vmem_cap = int(pltpu.get_tpu_info().vmem_capacity_bytes)
    except Exception:
        vmem_cap = 64 << 20                      # conservative: assume v7x-sized VMEM
    big_vmem = vmem_cap >= (100 << 20)           # v5e / v6e (128 MiB) vs v7x (64 MiB)

    # Target size of one f32 output tile (the pipeline double-buffers it).
    out_tile_budget = (8 << 20) if big_vmem else (4 << 20)

    # Row alignment so packed sub-32-bit dtypes get fully packed sublane tiles.
    row_align = {4: 8, 2: 16, 1: 32}.get(out_itemsize, 8)

    tb = out_tile_budget // (out_dim * 4)
    tb = max(row_align, (tb // row_align) * row_align)

    # Give the grid >= 2 steps when the batch splits cleanly, so v7x's two
    # TensorCores both get work.  Costs one extra ~0.35us step on 1-TC chips.
    if batch > 2 * row_align:
        half = pl.cdiv(pl.cdiv(batch, 2), row_align) * row_align
        tb = min(tb, half)

    if tb >= batch:
        tb = batch           # single block; block dim == full array dim is legal

    # Explicit VMEM footprint: double-buffered I/O tiles + f32 temporaries.
    out_tile_f32 = tb * out_dim * 4
    est = (2 * tb * out_dim * out_itemsize       # output double buffer
           + 2 * tb * dim * in_itemsize          # input double buffer
           + 5 * out_tile_f32                    # in-kernel f32 temporaries (overcount)
           + (2 << 20))                          # constants / headroom
    cap = (100 << 20) if big_vmem else (48 << 20)
    vmem_limit = int(min(max(est, 16 << 20), cap))
    return tb, vmem_limit


def _make_kernel(dim: int, dim_enc: int, df: int, use_matmul: bool):
    def kernel(*refs):
        if use_matmul:
            rep_ref, freq_ref, t_ref, out_ref = refs
        else:
            freq_ref, t_ref, out_ref = refs

        # Compute in f32 regardless of storage dtype (v5e has no bf16 VPU/EUP).
        t = t_ref[...].astype(jnp.float32)                       # (TB, dim)
        enc_in = t if dim_enc == dim else t[:, 0:1]              # (TB, dim_enc)
        freq_row = freq_ref[...]                                 # (1, df) f32

        if use_matmul:
            # Lane-dense replication of each theta column F times, done on the
            # otherwise-idle MXU against a constant 0/1 matrix.  No rank-3
            # intermediate, no (8,128)-crossing reshape/relayout.
            t_rep = jnp.dot(enc_in, rep_ref[...],
                            preferred_element_type=jnp.float32)  # (TB, df)
        else:
            t_rep = enc_in                                       # (TB, 1) broadcasts

        # Exact f32 multiply against base_freq * 2^f (matches the torch buffer).
        x = t_rep * freq_row                                     # (TB, df)

        # Single full-width store in the module's [t | cos | sin] layout.
        out = jnp.concatenate((t, jnp.cos(x), jnp.sin(x)), axis=1)
        out_ref[...] = out.astype(out_ref.dtype)

    return kernel


def positional_encoding(
    t_theta: jax.Array,
    *,
    n_freqs: int,
    encode_theta: bool = True,
    base_freq: float = 2.0 * pi,
    block_rows: int | None = None,
) -> jax.Array:
    """Pallas-backed equivalent of PositionalEncoding.forward."""
    batch, dim = t_theta.shape
    dim_enc = dim if encode_theta else 1
    df = dim_enc * n_freqs
    out_dim = dim + 2 * df
    out_dtype = t_theta.dtype

    in_itemsize = jnp.dtype(t_theta.dtype).itemsize
    out_itemsize = jnp.dtype(out_dtype).itemsize
    if block_rows is None:
        tb, vmem_limit = _plan_tiles(batch, dim, out_dim, in_itemsize, out_itemsize)
    else:
        tb = min(block_rows, batch)
        vmem_limit = 64 << 20
    grid = (pl.cdiv(batch, tb),)

    # Constants hoisted out of the kernel (exact f32 freqs, no int shifts).
    freqs = (float(base_freq) * (2.0 ** np.arange(n_freqs, dtype=np.float64)))
    freqs = freqs.astype(np.float32)
    freq_row = jnp.asarray(np.tile(freqs, dim_enc).reshape(1, df))       # (1, df)

    use_matmul = dim_enc > 1
    kernel = _make_kernel(dim, dim_enc, df, use_matmul)

    in_specs = []
    inputs = []
    if use_matmul:
        rep = np.zeros((dim_enc, df), dtype=np.float32)
        for d in range(dim_enc):
            rep[d, d * n_freqs:(d + 1) * n_freqs] = 1.0
        in_specs.append(pl.BlockSpec((dim_enc, df), lambda i: (0, 0)))   # resident const
        inputs.append(jnp.asarray(rep))
    in_specs.append(pl.BlockSpec((1, df), lambda i: (0, 0)))             # resident const
    inputs.append(freq_row)
    in_specs.append(pl.BlockSpec((tb, dim), lambda i: (i, 0)))
    inputs.append(t_theta)

    return pl.pallas_call(
        kernel,
        out_shape=jax.ShapeDtypeStruct((batch, out_dim), out_dtype),
        grid_spec=pltpu.PrefetchScalarGridSpec(
            num_scalar_prefetch=0,
            grid=grid,
            in_specs=in_specs,
            out_specs=pl.BlockSpec((tb, out_dim), lambda i: (i, 0)),
        ),
        compiler_params=pltpu.CompilerParams(
            dimension_semantics=("parallel",),
            vmem_limit_bytes=vmem_limit,
        ),
    )(*inputs)


def _reference(t_theta, n_freqs, encode_theta, base_freq):
    """Pure-JAX reference mirroring the PyTorch forward."""
    batch = t_theta.shape[0]
    freqs = jnp.asarray(
        (base_freq * (2.0 ** np.arange(n_freqs))).astype(np.float32)
    ).reshape(1, 1, n_freqs)
    if encode_theta:
        x = t_theta.reshape(batch, -1, 1) * freqs
    else:
        x = t_theta[:, 0:1].reshape(batch, 1, 1) * freqs
    cos_enc = jnp.cos(x).reshape(batch, -1)
    sin_enc = jnp.sin(x).reshape(batch, -1)
    return jnp.concatenate((t_theta, cos_enc, sin_enc), axis=1)


def _check(out, ref, dim):
    # The t-passthrough columns must match exactly.
    assert jnp.array_equal(out[:, :dim], ref[:, :dim])
    # cos/sin of |x| up to ~2^n_freqs amplify any last-ULP rounding difference
    # in x (e.g. from the MXU replication) by up to |x|*2^-23 ~ 1e-4, so compare
    # the encoding columns with an atol that covers that bound.
    assert jnp.allclose(out, ref, atol=2e-4, rtol=1e-5)


if __name__ == "__main__":
    key = jax.random.PRNGKey(0)

    batch, dim_theta = 2, 4          # t_theta: (batch, 1 + n_params) style input
    n_freqs = 8
    base_freq = 2.0 * pi

    t_theta = jax.random.normal(key, (batch, dim_theta), dtype=jnp.float32)

    # encode_theta=True path
    out = positional_encoding(
        t_theta, n_freqs=n_freqs, encode_theta=True, base_freq=base_freq
    )
    out = jax.block_until_ready(out)
    ref = _reference(t_theta, n_freqs, True, base_freq)
    assert out.shape == (batch, dim_theta + 2 * dim_theta * n_freqs)
    _check(out, ref, dim_theta)

    # encode_theta=False path (only the time column is encoded)
    out2 = positional_encoding(
        t_theta, n_freqs=n_freqs, encode_theta=False, base_freq=base_freq
    )
    out2 = jax.block_until_ready(out2)
    ref2 = _reference(t_theta, n_freqs, False, base_freq)
    assert out2.shape == (batch, dim_theta + 2 * n_freqs)
    _check(out2, ref2, dim_theta)

    # multi-block grid + partial final block (exercises tiling / megacore split)
    t_big = jax.random.normal(jax.random.PRNGKey(1), (200, dim_theta), jnp.float32)
    out3 = positional_encoding(
        t_big, n_freqs=n_freqs, encode_theta=True, base_freq=base_freq
    )
    out3 = jax.block_until_ready(out3)
    ref3 = _reference(t_big, n_freqs, True, base_freq)
    assert out3.shape == (200, dim_theta + 2 * dim_theta * n_freqs)
    _check(out3, ref3, dim_theta)

    print("KERNEL_OK")
</pallas_src>

<mosaic_0001>
module attributes {stable_mosaic.version = 11 : i64} {
  func.func @kernel(%arg0: i32, %arg1: memref<4x32xf32, #tpu.memory_space<vmem>>, %arg2: memref<1x32xf32, #tpu.memory_space<vmem>>, %arg3: memref<2x4xf32, #tpu.memory_space<vmem>>, %arg4: memref<2x68xf32, #tpu.memory_space<vmem>>) attributes {dimension_semantics = [#tpu.dimension_semantics<parallel>], iteration_bounds = array<i64: 1>, scalar_prefetch = 0 : i64, scratch_operands = 0 : i64, tpu.core_type = #tpu.core_type<tc>, window_params = [{pipeline_mode = #tpu.pipeline_mode<synchronous>, transform_indices = @transform_0, window_bounds = array<i64: 4, 32>}, {pipeline_mode = #tpu.pipeline_mode<synchronous>, transform_indices = @transform_1, window_bounds = array<i64: 1, 32>}, {transform_indices = @transform_2, window_bounds = array<i64: 2, 4>}, {transform_indices = @transform_3, window_bounds = array<i64: 2, 68>}]} {
    %c0 = arith.constant 0 : index
    %c0_0 = arith.constant 0 : index
    %0 = vector.load %arg3[%c0, %c0_0] : memref<2x4xf32, #tpu.memory_space<vmem>>, vector<2x4xf32>
    %c0_1 = arith.constant 0 : index
    %c0_2 = arith.constant 0 : index
    %1 = vector.load %arg2[%c0_1, %c0_2] : memref<1x32xf32, #tpu.memory_space<vmem>>, vector<1x32xf32>
    %c0_3 = arith.constant 0 : index
    %c0_4 = arith.constant 0 : index
    %2 = vector.load %arg1[%c0_3, %c0_4] : memref<4x32xf32, #tpu.memory_space<vmem>>, vector<4x32xf32>
    %cst = arith.constant dense<0.000000e+00> : vector<2x32xf32>
    %3 = tpu.matmul %0, %2, %cst {dimension_numbers = #tpu.dot_dimension_numbers<[1], [0], [0], [1], [0, 0, 1, 1], [], []>} : vector<2x4xf32>, vector<4x32xf32>, vector<2x32xf32> -> vector<2x32xf32>
    %4 = vector.broadcast %1 : vector<1x32xf32> to vector<2x32xf32>
    %5 = arith.mulf %3, %4 : vector<2x32xf32>
    %6 = math.cos %5 : vector<2x32xf32>
    %7 = math.sin %5 : vector<2x32xf32>
    %8 = tpu.concatenate %0, %6, %7 in 1 : vector<2x4xf32>, vector<2x32xf32>, vector<2x32xf32> -> vector<2x68xf32>
    %c0_5 = arith.constant 0 : index
    %c0_6 = arith.constant 0 : index
    %9 = vector.load %arg4[%c0_5, %c0_6] : memref<2x68xf32, #tpu.memory_space<vmem>>, vector<2x68xf32>
    tpu.vector_store %arg4[%c0_5, %c0_6], %8 {strides = array<i32>} : memref<2x68xf32, #tpu.memory_space<vmem>>, vector<2x68xf32>,
    return
  }
  func.func @transform_0(%arg0: i32) -> (i32, i32) {
    %c0_i32 = arith.constant 0 : i32
    %c0_i32_0 = arith.constant 0 : i32
    %c0_i32_1 = arith.constant 0 : i32
    return %c0_i32, %c0_i32_0 : i32, i32
  }
  func.func @transform_1(%arg0: i32) -> (i32, i32) {
    %c0_i32 = arith.constant 0 : i32
    %c0_i32_0 = arith.constant 0 : i32
    %c0_i32_1 = arith.constant 0 : i32
    return %c0_i32, %c0_i32_0 : i32, i32
  }
  func.func @transform_2(%arg0: i32) -> (i32, i32) {
    %c0_i32 = arith.constant 0 : i32
    %c0_i32_0 = arith.constant 0 : i32
    return %arg0, %c0_i32 : i32, i32
  }
  func.func @transform_3(%arg0: i32) -> (i32, i32) {
    %c0_i32 = arith.constant 0 : i32
    %c0_i32_0 = arith.constant 0 : i32
    return %arg0, %c0_i32 : i32, i32
  }
}

</mosaic_0001>

<llo_original>
// kernel: tpu_custom_call.1
$region0: #{tpu_custom_call.1}
  #allocation0 [shape = 'u32[]', space=smem, size = 0x4, offset = 0x4, fixed_abs, tag = 'smem constant byte address 0x4 - core index']
  #allocation1 [shape = 'u32[144,128]{1,0:T(1,128)}', space=vmem, size = 0x12000, scoped, tag = 'internal scratch']
  %s0 = inlined_call_operand.hbm [shape: f32[4,32], index: 0, kind: input, shape index: {}]
  %s1 = inlined_call_operand.vmem [shape: f32[1,32], index: 1, kind: input, shape index: {}]
  %s2 = inlined_call_operand.vmem [shape: f32[2,4], index: 2, kind: input, shape index: {}]
  %s3 = inlined_call_operand.hbm [shape: f32[2,68], index: 3, kind: output, shape index: {}]
  %s4 = sld [smem:[#allocation0]]
  $region26: #{tpu_custom_call.1} parent=0
    _
  %s6 = ssub.s32 1, %s4
  %s7 = scalar_select 0, %s6, %s4
  $region1: #{tpu_custom_call.1} parent=0
    #allocation2 [shape = 'u8[2048]{0}', space=vmem, size = 0x800, scoped, tag = 'input window, operand 0, single buffered']
    #allocation3 [shape = 's32[1]{0}', space=sflag, size = 0x4, scoped, tag = 'scoped memory for tpu_custom_call.1']
    #allocation4 [shape = 's32[1]{0}', space=sflag, size = 0x4, scoped, tag = 'scoped memory for tpu_custom_call.1']
    #allocation5 [shape = 'u8[1024]{0}', space=vmem, size = 0x400, scoped, tag = 'output window, operand 0, single buffered']
    %8 = vsyncpa [#allocation3], 0
    %9 = vsyncpa [#allocation4], 0
    // Predicated region
    $region2: #{tpu_custom_call.1} parent=1 // pred_check
      _
    $region3: #{tpu_custom_call.1} parent=1 // pred_check_branch
      %11 = sbr.rel (0) target = $region5
    $region4: #{tpu_custom_call.1} parent=1 // pred_region
      %s13 = ssub.s32 64, 64
      %14 = vsyncadd [#allocation3], %s13
      %s16 = sshll.u32 [#allocation2], 4
      %s17 = int_to_ptr.vmem [resolvable:$true] %s16
      %19 = dma.hbm_to_vmem [thread:$0]  %s0, 64, %s17, [#allocation3]
    $region5: #{tpu_custom_call.1} parent=1 // pred_fallthru
      _
    // Predicated region
    $region6: #{tpu_custom_call.1} parent=1 // pred_check
      _
    $region7: #{tpu_custom_call.1} parent=1 // pred_check_branch
      %21 = sbr.rel (0) target = $region9
    $region8: #{tpu_custom_call.1} parent=1 // pred_region
      _
    $region9: #{tpu_custom_call.1} parent=1 // pred_fallthru
      _
    // Predicated region
    $region10: #{tpu_custom_call.1} parent=1 // pred_check
      _
    $region11: #{tpu_custom_call.1} parent=1 // pred_check_branch
      %23 = sbr.rel (0) target = $region13
    $region12: #{tpu_custom_call.1} parent=1 // pred_region
      _
    $region13: #{tpu_custom_call.1} parent=1 // pred_fallthru
      _
    // Predicated region
    $region14: #{tpu_custom_call.1} parent=1 // pred_check
      _
    $region15: #{tpu_custom_call.1} parent=1 // pred_check_branch
      %25 = sbr.rel (0) target = $region17
    $region16: #{tpu_custom_call.1} parent=1 // pred_region
      %26 = dma.done [#allocation3], 64
    $region17: #{tpu_custom_call.1} parent=1 // pred_fallthru
      _
    %v27 = vld [vmem:[%s2] sm:$0x3]
    %v28 = vld [vmem:[%s1] sm:$0x1]
    %v29 = vld [vmem:[#allocation2] sm:$0xf]
    %vm30 = vcmask 31744
    %v32 = vsel %vm30, %v27, 0
    %vm34 = vcmask 1043456
    %v36 = vsel %vm34, %v29, 0
    %38 = vmatprep.subr.mxu0 0.0
    %39 = vmatpush1.msra.mxu0 %v36
    %40 = vmatprep.subr.mxu0 0.0
    %41 = vmatpush1.msra.mxu0 0.0
    %42 = vmatprep.subr.mxu0 0.0
    %43 = vmatpush1.msra.mxu0 0.0
    %44 = vmatprep.subr.mxu0 0.0
    %45 = vmatpush1.msra.mxu0 0.0
    %46 = vmatprep.subr.mxu0 0.0
    %47 = vmatpush1.msra.mxu0 0.0
    %48 = vmatprep.subr.mxu0 0.0
    %49 = vmatpush1.msra.mxu0 0.0
    %50 = vmatprep.subr.mxu0 0.0
    %51 = vmatpush1.msra.mxu0 0.0
    %52 = vmatprep.subr.mxu0 0.0
    %53 = vmatpush1.msra.mxu0 0.0
    %54 = vmatprep.subr.mxu0 0.0
    %55 = vmatpush1.msra.mxu0 0.0
    %56 = vmatprep.subr.mxu0 0.0
    %57 = vmatpush1.msra.mxu0 0.0
    %58 = vmatprep.subr.mxu0 0.0
    %59 = vmatpush1.msra.mxu0 0.0
    %60 = vmatprep.subr.mxu0 0.0
    %61 = vmatpush1.msra.mxu0 0.0
    %62 = vmatprep.subr.mxu0 0.0
    %63 = vmatpush1.msra.mxu0 0.0
    %64 = vmatprep.subr.mxu0 0.0
    %65 = vmatpush1.msra.mxu0 0.0
    %66 = vmatprep.subr.mxu0 0.0
    %67 = vmatpush1.msra.mxu0 0.0
    %68 = vmatprep.subr.mxu0 0.0
    %69 = vmatpush1.msra.mxu0 0.0
    %70 = vmatprep.subr.mxu0 0.0
    %71 = vmatpush1.msra.mxu0 0.0
    %72 = vmatprep.subr.mxu0 0.0
    %73 = vmatpush1.msra.mxu0 0.0
    %74 = vmatprep.subr.mxu0 0.0
    %75 = vmatpush1.msra.mxu0 0.0
    %76 = vmatprep.subr.mxu0 0.0
    %77 = vmatpush1.msra.mxu0 0.0
    %78 = vmatprep.subr.mxu0 0.0
    %79 = vmatpush1.msra.mxu0 0.0
    %80 = vmatprep.subr.mxu0 0.0
    %81 = vmatpush1.msra.mxu0 0.0
    %82 = vmatprep.subr.mxu0 0.0
    %83 = vmatpush1.msra.mxu0 0.0
    %84 = vmatprep.subr.mxu0 0.0
    %85 = vmatpush1.msra.mxu0 0.0
    %86 = vmatprep.subr.mxu0 0.0
    %87 = vmatpush1.msra.mxu0 0.0
    %88 = vmatprep.subr.mxu0 0.0
    %89 = vmatpush1.msra.mxu0 0.0
    %90 = vmatprep.subr.mxu0 0.0
    %91 = vmatpush1.msra.mxu0 0.0
    %92 = vmatprep.subr.mxu0 0.0
    %93 = vmatpush1.msra.mxu0 0.0
    %94 = vmatprep.subr.mxu0 0.0
    %95 = vmatpush1.msra.mxu0 0.0
    %96 = vmatprep.subr.mxu0 0.0
    %97 = vmatpush1.msra.mxu0 0.0
    %98 = vmatprep.subr.mxu0 0.0
    %99 = vmatpush1.msra.mxu0 0.0
    %100 = vmatprep.subr.mxu0 0.0
    %101 = vmatpush1.msra.mxu0 0.0
    %102 = vmatprep.mubr.f32.mxu0 0.0
    %103 = vmatmul.mubr.f32.gmra.mrb[0].mxu0 %v32
    %v104 = vpop.f32.mrb[0].mxu0
    %v105 = vadd.f32 0.0, %v104
    %v106 = vpop.f32.mrb[0].mxu0
    %107 = vdwg.mxu0
    %v109 = vlaneseq
    %v110 = vshrl.u32 %v109, 7
    %v111 = vsub.s32 0, %v110
    %v112 = vrot.slane %v28, %v111
    %v114 = vmul.f32 %v105, %v112
    %v115 = vand.u32 2147483647, %v114
    %vm116 = vcmp.le.f32.partialorder %v115, 0.7853982
    %vm117 = vcmp.lt.s32.totalorder %v114, 0
    %v118 = vand.u32 %v114, 2139095040
    %v119 = vshrl.u32 %v118, 23
    %v120 = vsub.s32 %v119, 127
    %v121 = vand.u32 2147483647, %v114
    %v122 = vand.u32 %v121, 8388607
    %v123 = vor.u32 %v122, 8388608
    %v124 = vsub.s32 0, %v123
    %v125 = vadd.s32 %v120, 1
    %vm126 = vcmp.gt.s32.totalorder %v125, 0
    %v127 = vsel %vm126, %v125, 0
    %v128 = vshrl.u32 %v127, 5
    %v129 = vand.u32 %v127, 31
    %v130 = vsub.s32 32, %v129
    %v131 = vshrl.u32 683565275, %v130
    %v132 = vshll.u32 683565275, %v129
    %v133 = vshrl.u32 2475754826, %v130
    %v134 = vor.u32 %v132, %v133
    %v135 = vshll.u32 2475754826, %v129
    %v136 = vshrl.u32 2131351028, %v130
    %v137 = vor.u32 %v135, %v136
    %v138 = vshll.u32 2131351028, %v129
    %v139 = vshrl.u32 2102212464, %v130
    %v140 = vor.u32 %v138, %v139
    %v141 = vshll.u32 2102212464, %v129
    %v142 = vshrl.u32 920167782, %v130
    %v143 = vor.u32 %v141, %v142
    %v144 = vshll.u32 920167782, %v129
    %v145 = vshrl.u32 1326507024, %v130
    %v146 = vor.u32 %v144, %v145
    %vm147 = vcmp.lt.s32.totalorder %v128, 1
    %vm148 = vcmp.lt.s32.totalorder %v128, 2
    %vm149 = vcmp.lt.s32.totalorder %v128, 3
    %vm150 = vcmp.lt.s32.totalorder %v128, 4
    %v151 = vsel %vm147, %v131, %v134
    %v152 = vsel %vm150, %v140, 2102212464
    %v153 = vsel %vm149, %v137, %v152
    %v154 = vsel %vm148, %v151, %v153
    %v155 = vsel %vm147, %v134, %v137
    %v156 = vsel %vm150, %v143, 920167782
    %v157 = vsel %vm149, %v140, %v156
    %v158 = vsel %vm148, %v155, %v157
    %v159 = vsel %vm147, %v137, %v140
    %v160 = vsel %vm150, %v146, 1326507024
    %v161 = vsel %vm149, %v143, %v160
    %v162 = vsel %vm148, %v159, %v161
    %v163 = vshll.u32 %v123, 8
    %v164 = vmul.u32.u64.compose %v163, %v162
    %v165 = vextract.low.u32 %v164
    %v166 = vextract.high.u32 %v164
    %v167 = vmul.u32.u64.compose %v163, %v158
    %v168 = vextract.low.u32 %v167
    %v169 = vextract.high.u32 %v167
    %v170 = vmul.u32 %v163, %v154
    %v171 = vadd.s32 %v166, %v168
    %vm172 = vc.u32 %v166, %v168
    %v173 = vadd.s32 %v169, 1
    %v174 = vsel %vm172, %v173, %v169
    %v175 = vadd.s32 %v170, %v174
    %v176 = vadd.s32 %v175, 536870912
    %v177 = vshrl.u32 %v176, 30
    %v178 = vshll.u32 %v177, 30
    %v179 = vsub.s32 %v175, %v178
    %vm180 = vcmp.lt.s32.totalorder %v179, 0
    %v181 = vsub.s32 0, %v179
    %v182 = vsel %vm180, %v181, %v179
    %v183 = vclz %v182
    %v184 = vsub.s32 %v183, 2
    %vm185 = vcmp.gt.s32.totalorder 0, %v184
    %v186 = vsel %vm185, 0, %v184
    %v187 = vsub.s32 32, %v186
    %v188 = vshll.u32 %v179, %v186
    %v189 = vshrl.u32 %v171, %v187
    %v190 = vor.u32 %v188, %v189
    %v191 = vsub.s32 4294967266, %v186
    %v192 = vadd.s32 %v191, 127
    %v193 = vshll.u32 %v192, 23
    %v194 = vor.u32 4788187, %v193
    %v195 = vand.u32 2147483647, %v194
    %v197 = vcvt.s32.f32 %v190
    %v198 = vmul.f32 %v197, %v195
    %v199 = vxor.u32 %v198, 2147483648
    %v200 = vsel %vm117, %v199, %v198
    %v201 = vsub.s32 4, %v177
    %v202 = vsel %vm117, %v201, %v177
    %v203 = vsel %vm116, %v114, %v200
    %v204 = vsel %vm116, 0, %v202
    %v205 = vcosq.f32.pop %v203
    %v206 = vsinq.f32.pop %v203
    %vm207 = vweird.f32 %v114
    %v208 = vand.u32 %v204, 3
    %vm209 = vcmp.lt.s32.totalorder %v208, 2
    %vm210 = vcmp.eq.s32.totalorder %v208, 0
    %v211 = vxor.u32 %v206, 2147483648
    %v212 = vsel %vm210, %v205, %v211
    %vm213 = vcmp.eq.s32.totalorder %v208, 2
    %v214 = vxor.u32 %v205, 2147483648
    %v215 = vsel %vm213, %v214, %v206
    %v216 = vsel %vm209, %v212, %v215
    %v217 = vsel %vm207, nan, %v216
    %v218 = vand.u32 2147483647, %v114
    %vm219 = vcmp.le.f32.partialorder %v218, 0.7853982
    %vm220 = vcmp.lt.s32.totalorder %v114, 0
    %v221 = vand.u32 %v114, 2139095040
    %v222 = vshrl.u32 %v221, 23
    %v223 = vsub.s32 %v222, 127
    %v224 = vand.u32 2147483647, %v114
    %v225 = vand.u32 %v224, 8388607
    %v226 = vor.u32 %v225, 8388608
    %v227 = vsub.s32 0, %v226
    %v228 = vadd.s32 %v223, 1
    %vm229 = vcmp.gt.s32.totalorder %v228, 0
    %v230 = vsel %vm229, %v228, 0
    %v231 = vshrl.u32 %v230, 5
    %v232 = vand.u32 %v230, 31
    %v233 = vsub.s32 32, %v232
    %v234 = vshrl.u32 683565275, %v233
    %v235 = vshll.u32 683565275, %v232
    %v236 = vshrl.u32 2475754826, %v233
    %v237 = vor.u32 %v235, %v236
    %v238 = vshll.u32 2475754826, %v232
    %v239 = vshrl.u32 2131351028, %v233
    %v240 = vor.u32 %v238, %v239
    %v241 = vshll.u32 2131351028, %v232
    %v242 = vshrl.u32 2102212464, %v233
    %v243 = vor.u32 %v241, %v242
    %v244 = vshll.u32 2102212464, %v232
    %v245 = vshrl.u32 920167782, %v233
    %v246 = vor.u32 %v244, %v245
    %v247 = vshll.u32 920167782, %v232
    %v248 = vshrl.u32 1326507024, %v233
    %v249 = vor.u32 %v247, %v248
    %vm250 = vcmp.lt.s32.totalorder %v231, 1
    %vm251 = vcmp.lt.s32.totalorder %v231, 2
    %vm252 = vcmp.lt.s32.totalorder %v231, 3
    %vm253 = vcmp.lt.s32.totalorder %v231, 4
    %v254 = vsel %vm250, %v234, %v237
    %v255 = vsel %vm253, %v243, 2102212464
    %v256 = vsel %vm252, %v240, %v255
    %v257 = vsel %vm251, %v254, %v256
    %v258 = vsel %vm250, %v237, %v240
    %v259 = vsel %vm253, %v246, 920167782
    %v260 = vsel %vm252, %v243, %v259
    %v261 = vsel %vm251, %v258, %v260
    %v262 = vsel %vm250, %v240, %v243
    %v263 = vsel %vm253, %v249, 1326507024
    %v264 = vsel %vm252, %v246, %v263
    %v265 = vsel %vm251, %v262, %v264
    %v266 = vshll.u32 %v226, 8
    %v267 = vmul.u32.u64.compose %v266, %v265
    %v268 = vextract.low.u32 %v267
    %v269 = vextract.high.u32 %v267
    %v270 = vmul.u32.u64.compose %v266, %v261
    %v271 = vextract.low.u32 %v270
    %v272 = vextract.high.u32 %v270
    %v273 = vmul.u32 %v266, %v257
    %v274 = vadd.s32 %v269, %v271
    %vm275 = vc.u32 %v269, %v271
    %v276 = vadd.s32 %v272, 1
    %v277 = vsel %vm275, %v276, %v272
    %v278 = vadd.s32 %v273, %v277
    %v279 = vadd.s32 %v278, 536870912
    %v280 = vshrl.u32 %v279, 30
    %v281 = vshll.u32 %v280, 30
    %v282 = vsub.s32 %v278, %v281
    %vm283 = vcmp.lt.s32.totalorder %v282, 0
    %v284 = vsub.s32 0, %v282
    %v285 = vsel %vm283, %v284, %v282
    %v286 = vclz %v285
    %v287 = vsub.s32 %v286, 2
    %vm288 = vcmp.gt.s32.totalorder 0, %v287
    %v289 = vsel %vm288, 0, %v287
    %v290 = vsub.s32 32, %v289
    %v291 = vshll.u32 %v282, %v289
    %v292 = vshrl.u32 %v274, %v290
    %v293 = vor.u32 %v291, %v292
    %v294 = vsub.s32 4294967266, %v289
    %v295 = vadd.s32 %v294, 127
    %v296 = vshll.u32 %v295, 23
    %v297 = vor.u32 4788187, %v296
    %v298 = vand.u32 2147483647, %v297
    %v300 = vcvt.s32.f32 %v293
    %v301 = vmul.f32 %v300, %v298
    %v302 = vxor.u32 %v301, 2147483648
    %v303 = vsel %vm220, %v302, %v301
    %v304 = vsub.s32 4, %v280
    %v305 = vsel %vm220, %v304, %v280
    %v306 = vsel %vm219, %v114, %v303
    %v307 = vsel %vm219, 0, %v305
    %v308 = vcosq.f32.pop %v306
    %v309 = vsinq.f32.pop %v306
    %vm310 = vweird.f32 %v114
    %v311 = vadd.s32 %v307, 3
    %v312 = vand.u32 %v311, 3
    %vm313 = vcmp.lt.s32.totalorder %v312, 2
    %vm314 = vcmp.eq.s32.totalorder %v312, 0
    %v315 = vxor.u32 %v309, 2147483648
    %v316 = vsel %vm314, %v308, %v315
    %vm317 = vcmp.eq.s32.totalorder %v312, 2
    %v318 = vxor.u32 %v308, 2147483648
    %v319 = vsel %vm317, %v318, %v309
    %v320 = vsel %vm313, %v316, %v319
    %v321 = vsel %vm310, nan, %v320
    %323 = vrot.lane.b32.xlu0 %v217, 4
    %v324 = vpop.permute.xlu0 %323
    %327 = vrot.lane.b32.xlu0 %v321, 36
    %v328 = vpop.permute.xlu0 %327
    %v330 = vsel %vm30, %v27, %v324
    %vm331 = vcmask 293888
    %v332 = vsel %vm331, %v330, %v328
    %vm333 = vcmask 549888
    %334 = vst.msk [vmem:[#allocation5] sm:$0x3] %vm333, %v332
    // Predicated region
    $region18: #{tpu_custom_call.1} parent=1 // pred_check
      _
    $region19: #{tpu_custom_call.1} parent=1 // pred_check_branch
      %336 = sbr.rel (0) target = $region21
    $region20: #{tpu_custom_call.1} parent=1 // pred_region
      %s338 = ssub.s32 32, 32
      %339 = vsyncadd [#allocation4], %s338
      %s341 = sshll.u32 [#allocation5], 4
      %s342 = int_to_ptr.vmem [resolvable:$true] %s341
      %344 = dma.vmem_to_hbm [thread:$0]  %s342, 32, %s3, [#allocation4]
    $region21: #{tpu_custom_call.1} parent=1 // pred_fallthru
      _
    // Predicated region
    $region22: #{tpu_custom_call.1} parent=1 // pred_check
      _
    $region23: #{tpu_custom_call.1} parent=1 // pred_check_branch
      %346 = sbr.rel (0) target = $region25
    $region24: #{tpu_custom_call.1} parent=1 // pred_region
      %347 = dma.done [#allocation4], 32
    $region25: #{tpu_custom_call.1} parent=1 // pred_fallthru
      _
    %348 = vsyncpa [#allocation3], 1
    %349 = vsyncpa [#allocation4], 1

</llo_original>
